<compile_context>
chip_gen: v7x
topology: tpu7x:2x2x1
jax: 0.10.0
libtpu: 0.0.40
codegen_flags: <defaults>
</compile_context>

<pallas_src>
import jax
import jax.numpy as jnp
from jax import lax
from jax.experimental import pallas as pl
from jax.experimental.pallas import tpu as pltpu


def _vmem_capacity_bytes():
    try:
        info = pltpu.get_tpu_info()
        cap = getattr(info, "vmem_capacity_bytes", None)
        if cap:
            return int(cap)
    except Exception:
        pass
    return 64 << 20  # conservative fallback (v7x)


# --------------------------------------------------------------------------
# 1) Batch-independent softmax statistics: rowmax and rowsum(exp(W - rowmax)).
# --------------------------------------------------------------------------
def _topic_stats_kernel(w_ref, m_ref, d_ref):
    w = w_ref[...]                                    # (Tt, V)
    m = jnp.max(w, axis=1, keepdims=True)             # (Tt, 1)
    e = jnp.exp(w - m)                                # EUP
    m_ref[...] = m
    d_ref[...] = jnp.sum(e, axis=1, keepdims=True)    # f32 lane reduce (XLU)


def _topic_stats(w, vmem_cap):
    """Returns (rowmax, rowsum_exp), each (T, 1) f32, tiled over topic rows."""
    t, v = w.shape
    budget = max(8 << 20, vmem_cap - (16 << 20))
    row_bytes = 4 * v

    # Row-tile candidates: full T, or multiples of 8 that divide T.
    cands = sorted({t} | {d for d in range(8, t, 8) if t % d == 0}, reverse=True)
    tt = None
    for c in cands:
        if 2 * c * row_bytes + (1 << 20) <= budget:   # double-buffered W tile
            tt = c
            break
    t_pad, w_in = t, w
    if tt is None:
        # Pad rows up to a multiple of 8 and tile 8 rows per step.
        tt = 8
        t_pad = pl.cdiv(t, 8) * 8
        if t_pad != t:
            w_in = jnp.pad(w, ((0, t_pad - t), (0, 0)))

    needed = 2 * tt * row_bytes + (1 << 20)
    vmem_limit = min(vmem_cap - (2 << 20), max(32 << 20, needed + (4 << 20)))

    m, d = pl.pallas_call(
        _topic_stats_kernel,
        out_shape=(
            jax.ShapeDtypeStruct((t_pad, 1), jnp.float32),
            jax.ShapeDtypeStruct((t_pad, 1), jnp.float32),
        ),
        grid=(t_pad // tt,),
        in_specs=[pl.BlockSpec((tt, v), lambda i: (i, 0))],
        out_specs=(
            pl.BlockSpec((tt, 1), lambda i: (i, 0)),
            pl.BlockSpec((tt, 1), lambda i: (i, 0)),
        ),
        compiler_params=pltpu.CompilerParams(
            dimension_semantics=("parallel",),
            vmem_limit_bytes=vmem_limit,
        ),
    )(w_in)
    if t_pad != t:
        m, d = m[:t], d[:t]
    return m, d


# --------------------------------------------------------------------------
# 2) Mixture kernel: log((z * inv_denom) @ exp(W - rowmax)) == log(z @ softmax(W))
# --------------------------------------------------------------------------
def _ntm_mixture_kernel(z_ref, w_ref, m_ref, inv_ref, out_ref):
    e = jnp.exp(w_ref[...] - m_ref[...])                     # (T, Vt)
    z_scaled = z_ref[...] * inv_ref[...]                     # (bt, T) * (1, T)
    mix = jnp.dot(z_scaled, e,
                  precision=lax.Precision.HIGHEST,
                  preferred_element_type=jnp.float32)        # (bt, Vt), MXU
    out_ref[...] = jnp.log(mix)                              # log(0) = -inf, as torch


def revised_ntm_topics_forward(z, w, *, batch_tile=512, vocab_tile=8192):
    """z: (batch, topic_size) f32, w: (topic_size, vocab_size) f32
    -> log(z @ softmax(w, axis=1)), shape (batch, vocab_size), f32."""
    z = z.astype(jnp.float32)
    w = w.astype(jnp.float32)
    batch, t = z.shape
    t2, v = w.shape
    assert t2 == t

    cap = _vmem_capacity_bytes()
    budget = max(8 << 20, cap - (16 << 20))

    # ---- batch tiling ----------------------------------------------------
    if batch <= 8:
        padded_b, bt_cands, need_two = batch, [batch], False
    else:
        padded_b = pl.cdiv(batch, 8) * 8
        bt_cands = sorted({d for d in range(8, padded_b + 1, 8)
                           if padded_b % d == 0}, reverse=True)
        bt_cands = [d for d in bt_cands if d <= batch_tile] or [8]
        # >= 2 batch steps so "parallel" semantics can shard across v7x's 2 TCs.
        need_two = padded_b >= 16
        if need_two:
            bt_cands = [d for d in bt_cands if d < padded_b] or [8]

    # ---- joint (batch-tile, vocab-tile) selection vs the VMEM budget ------
    def mix_vmem(bt_, vt_):
        # double-buffered z / W / out tiles + tiny resident stats + slop
        return 4 * (2 * bt_ * t + 2 * t * vt_ + 2 * bt_ * vt_) + (1 << 20)

    bt = bt_cands[-1]
    vt, v_pad = 128, pl.cdiv(v, 128) * 128
    for cand in bt_cands:                      # descending
        if mix_vmem(cand, v) <= budget:
            bt, vt, v_pad = cand, v, v         # whole vocab in one lane-dense block
            break
        avail = (budget - (1 << 20)) // 4 - 2 * cand * t
        max_vt = (avail // (2 * (t + cand))) // 128 * 128
        max_vt = min(max_vt, (vocab_tile // 128) * 128)
        if max_vt >= 128:
            bt, vt = cand, max_vt
            v_pad = pl.cdiv(v, vt) * vt
            break

    nb = padded_b // bt
    nv = v_pad // vt

    # ---- pad inputs (vocab pad value -> exp == 0, so stats stay exact) ----
    w_in = w if v_pad == v else jnp.pad(w, ((0, 0), (0, v_pad - v)),
                                        constant_values=-1e30)
    z_in = z if padded_b == batch else jnp.pad(z, ((0, padded_b - batch), (0, 0)))

    # ---- batch-independent stats (tiny outputs; no T×V HBM round-trip) ----
    rowmax, denom = _topic_stats(w_in, cap)
    inv_row = (1.0 / denom).reshape(1, t)       # (1, T): folded into z in-kernel

    needed = mix_vmem(bt, vt)
    vmem_limit = min(cap - (2 << 20), max(32 << 20, needed + (4 << 20)))

    out = pl.pallas_call(
        _ntm_mixture_kernel,
        out_shape=jax.ShapeDtypeStruct((padded_b, v_pad), jnp.float32),
        grid=(nv, nb),            # vocab outer -> each W tile is DMA'd exactly once
        in_specs=[
            pl.BlockSpec((bt, t), lambda jv, ib: (ib, 0)),   # z (tiny)
            pl.BlockSpec((t, vt), lambda jv, ib: (0, jv)),   # W tile (streamed)
            pl.BlockSpec((t, 1), lambda jv, ib: (0, 0)),     # rowmax (resident)
            pl.BlockSpec((1, t), lambda jv, ib: (0, 0)),     # 1/denom (resident)
        ],
        out_specs=pl.BlockSpec((bt, vt), lambda jv, ib: (ib, jv)),
        compiler_params=pltpu.CompilerParams(
            dimension_semantics=("parallel", "parallel"),
            vmem_limit_bytes=vmem_limit,
        ),
    )(z_in, w_in, rowmax, inv_row)

    if padded_b != batch or v_pad != v:
        out = out[:batch, :v]
    return out


if __name__ == "__main__":
    key = jax.random.PRNGKey(0)
    k_w, k_z = jax.random.split(key)

    batch = 8
    topic_size = 16
    vocab_size = 256

    # Xavier-normal init for topic.weight (topic_size, vocab_size), bias=False.
    xavier_std = (2.0 / (topic_size + vocab_size)) ** 0.5
    w = (jax.random.normal(k_w, (topic_size, vocab_size), dtype=jnp.float32)
         * xavier_std)

    # z is a topic mixture (nonnegative, sums to 1) so log(mixture) is finite.
    z = jax.nn.softmax(
        jax.random.normal(k_z, (batch, topic_size), dtype=jnp.float32), axis=1)

    out = revised_ntm_topics_forward(z, w)
    out = jax.block_until_ready(out)

    ref = jnp.log(jnp.matmul(z, jax.nn.softmax(w, axis=1),
                             precision=lax.Precision.HIGHEST))
    assert out.shape == (batch, vocab_size)
    assert jnp.allclose(out, ref, atol=1e-4, rtol=1e-4), (
        float(jnp.max(jnp.abs(out - ref))))

    print("KERNEL_OK")
</pallas_src>

<mosaic_0001>
module attributes {stable_mosaic.version = 11 : i64} {
  func.func @_topic_stats_kernel(%arg0: i32, %arg1: memref<16x256xf32, #tpu.memory_space<vmem>>, %arg2: memref<16x1xf32, #tpu.memory_space<vmem>>, %arg3: memref<16x1xf32, #tpu.memory_space<vmem>>) attributes {dimension_semantics = [#tpu.dimension_semantics<parallel>], iteration_bounds = array<i64: 1>, scalar_prefetch = 0 : i64, scratch_operands = 0 : i64, tpu.core_type = #tpu.core_type<tc>, window_params = [{transform_indices = @transform_0, window_bounds = array<i64: 16, 256>}, {transform_indices = @transform_1, window_bounds = array<i64: 16, 1>}, {transform_indices = @transform_2, window_bounds = array<i64: 16, 1>}]} {
    %c0 = arith.constant 0 : index
    %c0_0 = arith.constant 0 : index
    %0 = vector.load %arg1[%c0, %c0_0] : memref<16x256xf32, #tpu.memory_space<vmem>>, vector<16x256xf32>
    %cst = arith.constant dense<0xFF800000> : vector<16xf32>
    %1 = vector.multi_reduction <maximumf>, %0, %cst [1] : vector<16x256xf32> to vector<16xf32>
    %2 = vector.shape_cast %1 : vector<16xf32> to vector<16x1xf32>
    %3 = vector.broadcast %2 : vector<16x1xf32> to vector<16x256xf32>
    %4 = arith.subf %0, %3 : vector<16x256xf32>
    %5 = math.exp %4 : vector<16x256xf32>
    %c0_1 = arith.constant 0 : index
    %c0_2 = arith.constant 0 : index
    %6 = vector.load %arg2[%c0_1, %c0_2] : memref<16x1xf32, #tpu.memory_space<vmem>>, vector<16x1xf32>
    tpu.vector_store %arg2[%c0_1, %c0_2], %2 {strides = array<i32>} : memref<16x1xf32, #tpu.memory_space<vmem>>, vector<16x1xf32>,
    %cst_3 = arith.constant dense<0.000000e+00> : vector<16xf32>
    %7 = vector.multi_reduction <add>, %5, %cst_3 [1] : vector<16x256xf32> to vector<16xf32>
    %8 = vector.shape_cast %7 : vector<16xf32> to vector<16x1xf32>
    %c0_4 = arith.constant 0 : index
    %c0_5 = arith.constant 0 : index
    %9 = vector.load %arg3[%c0_4, %c0_5] : memref<16x1xf32, #tpu.memory_space<vmem>>, vector<16x1xf32>
    tpu.vector_store %arg3[%c0_4, %c0_5], %8 {strides = array<i32>} : memref<16x1xf32, #tpu.memory_space<vmem>>, vector<16x1xf32>,
    return
  }
  func.func @transform_0(%arg0: i32) -> (i32, i32) {
    %c0_i32 = arith.constant 0 : i32
    %c0_i32_0 = arith.constant 0 : i32
    return %arg0, %c0_i32 : i32, i32
  }
  func.func @transform_1(%arg0: i32) -> (i32, i32) {
    %c0_i32 = arith.constant 0 : i32
    %c0_i32_0 = arith.constant 0 : i32
    return %arg0, %c0_i32 : i32, i32
  }
  func.func @transform_2(%arg0: i32) -> (i32, i32) {
    %c0_i32 = arith.constant 0 : i32
    %c0_i32_0 = arith.constant 0 : i32
    return %arg0, %c0_i32 : i32, i32
  }
}

</mosaic_0001>

<llo_original>
// kernel: tpu_custom_call.1
$region0: #{tpu_custom_call.1}
  #allocation0 [shape = 'u32[]', space=smem, size = 0x4, offset = 0x4, fixed_abs, tag = 'smem constant byte address 0x4 - core index']
  #allocation1 [shape = 'u32[144,128]{1,0:T(1,128)}', space=vmem, size = 0x12000, scoped, tag = 'internal scratch']
  %s0 = inlined_call_operand.hbm [shape: f32[16,256], index: 0, kind: input, shape index: {}]
  %s1 = inlined_call_operand.vmem [shape: f32[16,1], index: 1, kind: output, shape index: {0}]
  %s2 = inlined_call_operand.vmem [shape: f32[16,1], index: 2, kind: output, shape index: {1}]
  %3 = xla_tuple %s1, %s2
  %s4 = sld [smem:[#allocation0]]
  $region26: #{tpu_custom_call.1} parent=0
    _
  %s6 = ssub.s32 1, %s4
  %s7 = scalar_select 0, %s6, %s4
  $region1: #{tpu_custom_call.1} parent=0
    #allocation2 [shape = 'u8[16384]{0}', space=vmem, size = 0x4000, scoped, tag = 'input window, operand 0, single buffered']
    #allocation3 [shape = 's32[1]{0}', space=sflag, size = 0x4, scoped, tag = 'scoped memory for tpu_custom_call.1']
    %8 = vsyncpa [#allocation3], 0
    // Predicated region
    $region2: #{tpu_custom_call.1} parent=1 // pred_check
      _
    $region3: #{tpu_custom_call.1} parent=1 // pred_check_branch
      %10 = sbr.rel (0) target = $region5
    $region4: #{tpu_custom_call.1} parent=1 // pred_region
      %s12 = ssub.s32 512, 512
      %13 = vsyncadd [#allocation3], %s12
      %s14 = sshll.u32 [#allocation2], 4
      %s15 = int_to_ptr.vmem [resolvable:$true] %s14
      %20 = dma.hbm_to_vmem [thread:$0]  %s0, 512, %s15, [#allocation3], 256, 256, 16
    $region5: #{tpu_custom_call.1} parent=1 // pred_fallthru
      _
    // Predicated region
    $region6: #{tpu_custom_call.1} parent=1 // pred_check
      _
    $region7: #{tpu_custom_call.1} parent=1 // pred_check_branch
      %22 = sbr.rel (0) target = $region9
    $region8: #{tpu_custom_call.1} parent=1 // pred_region
      %23 = dma.done [#allocation3], 512
    $region9: #{tpu_custom_call.1} parent=1 // pred_fallthru
      _
    %v24 = vld [vmem:[#allocation2] sm:$0xff]
    %v25 = vld [vmem:[#allocation2 + $0x8] sm:$0xff]
    %v26 = vld [vmem:[#allocation2 + $0x10] sm:$0xff]
    %v27 = vld [vmem:[#allocation2 + $0x18] sm:$0xff]
    %v28 = vmax.f32 %v24, %v25
    %29 = vmax.xlane.f32.xlu0 %v28
    %v30 = vpop.xlane.xlu0 %29
    %v31 = vmax.f32 %v26, %v27
    %32 = vmax.xlane.f32.xlu0 %v31
    %v33 = vpop.xlane.xlu0 %32
    %v34 = vsub.f32 %v24, %v30
    %v35 = vsub.f32 %v25, %v30
    %v36 = vsub.f32 %v26, %v33
    %v37 = vsub.f32 %v27, %v33
    %v38 = vmul.f32 %v34, 1.442695
    %v39 = vpow.pop %v38
    %v40 = vmul.f32 %v35, 1.442695
    %v41 = vpow.pop %v40
    %v42 = vmul.f32 %v36, 1.442695
    %v43 = vpow.pop %v42
    %v44 = vmul.f32 %v37, 1.442695
    %v45 = vpow.pop %v44
    %vm46 = vcmask 7168
    %47 = vst.msk [vmem:[%s1] sm:$0xff] %vm46, %v30
    %48 = vst.msk [vmem:[%s1 + $0x8] sm:$0xff] %vm46, %v33
    %v49 = vadd.f32 %v39, %v41
    %50 = vadd.xlane.f32.xlu0 %v49
    %v51 = vpop.xlane.xlu0 %50
    %v52 = vadd.f32 %v43, %v45
    %53 = vadd.xlane.f32.xlu0 %v52
    %v54 = vpop.xlane.xlu0 %53
    %55 = vst.msk [vmem:[%s2] sm:$0xff] %vm46, %v51
    %56 = vst.msk [vmem:[%s2 + $0x8] sm:$0xff] %vm46, %v54
    // Predicated region
    $region10: #{tpu_custom_call.1} parent=1 // pred_check
      _
    $region11: #{tpu_custom_call.1} parent=1 // pred_check_branch
      %58 = sbr.rel (0) target = $region13
    $region12: #{tpu_custom_call.1} parent=1 // pred_region
      _
    $region13: #{tpu_custom_call.1} parent=1 // pred_fallthru
      _
    // Predicated region
    $region14: #{tpu_custom_call.1} parent=1 // pred_check
      _
    $region15: #{tpu_custom_call.1} parent=1 // pred_check_branch
      %60 = sbr.rel (0) target = $region17
    $region16: #{tpu_custom_call.1} parent=1 // pred_region
      _
    $region17: #{tpu_custom_call.1} parent=1 // pred_fallthru
      _
    // Predicated region
    $region18: #{tpu_custom_call.1} parent=1 // pred_check
      _
    $region19: #{tpu_custom_call.1} parent=1 // pred_check_branch
      %62 = sbr.rel (0) target = $region21
    $region20: #{tpu_custom_call.1} parent=1 // pred_region
      _
    $region21: #{tpu_custom_call.1} parent=1 // pred_fallthru
      _
    // Predicated region
    $region22: #{tpu_custom_call.1} parent=1 // pred_check
      _
    $region23: #{tpu_custom_call.1} parent=1 // pred_check_branch
      %64 = sbr.rel (0) target = $region25
    $region24: #{tpu_custom_call.1} parent=1 // pred_region
      _
    $region25: #{tpu_custom_call.1} parent=1 // pred_fallthru
      _
    %65 = vsyncpa [#allocation3], 1

</llo_original>
